<compile_context>
chip_gen: v7x
topology: tpu7x:2x2x1
jax: 0.10.0
libtpu: 0.0.40
codegen_flags: <defaults>
</compile_context>

<pallas_src>
import jax
import jax.numpy as jnp
import numpy as np
from jax.experimental import pallas as pl
from jax.experimental.pallas import tpu as pltpu

EPS = 1e-5
# bf16 MXU inputs ~double matmul throughput on v6e/v7x; kept f32 so the 1e-4 check
# against the f32 reference holds on every generation (incl. v5e, which has no bf16 VPU).
MXU_IN_DTYPE = jnp.float32


def _conv_bn_relu_stage(act, hp_ref, bdw_ref, pavg, gamma_l, beta_l):
    """One Conv3x3(pad=1) + BatchNorm2d(training-mode batch stats) + ReLU stage.

    act     : (N, H, W*C)        input activation, (w, c) flattened on the lane axis
    hp_ref  : (N, H+2, W*C)      VMEM scratch carrying the H-halo
    bdw_ref : (3, W*C, W*Cout)   banded weights (one per kernel row); the W-halo is
                                 encoded as zero bands, so no W padding is needed
    pavg    : (W*Cout, W*Cout)   per-channel pooling matrix (sum over w, replicate
                                 over w) with 1/(N*H*W) folded in
    gamma_l : (1, W*Cout)        BN gamma, tiled over w
    beta_l  : (1, W*Cout)        BN beta, tiled over w
    returns : (N*H, W*Cout)      lane-dense activation (f32)
    """
    N, H, WC = act.shape
    WCout = bdw_ref.shape[2]

    # ---- in-kernel halo: zero-fill the top/bottom border rows, write the interior ----
    hp_ref[:, 0:1, :] = jnp.zeros((N, 1, WC), jnp.float32)
    hp_ref[:, H + 1:H + 2, :] = jnp.zeros((N, 1, WC), jnp.float32)
    hp_ref[:, 1:H + 1, :] = act
    hp = hp_ref[...]                    # only a few vregs: load once, slice in-register

    # ---- conv: 3 banded matmuls (one per kernel row), lane-dense f32 accumulator ----
    acc = jnp.zeros((N * H, WCout), jnp.float32)
    for dh in range(3):
        lhs = hp[:, dh:dh + H, :].reshape(N * H, WC)      # leading-dim merge only
        acc = acc + jnp.dot(lhs.astype(MXU_IN_DTYPE),
                            bdw_ref[dh].astype(MXU_IN_DTYPE),
                            preferred_element_type=jnp.float32)
    # (conv bias omitted: it cancels exactly under training-mode BatchNorm)

    # ---- BN: single-pass per-channel batch statistics, folded into one FMA ----
    colsum = jnp.sum(acc, axis=0, keepdims=True)            # (1, W*Cout)
    colsumsq = jnp.sum(acc * acc, axis=0, keepdims=True)    # (1, W*Cout)
    mean_l = jnp.dot(colsum, pavg, preferred_element_type=jnp.float32)
    ey2_l = jnp.dot(colsumsq, pavg, preferred_element_type=jnp.float32)
    var_l = ey2_l - mean_l * mean_l
    scale_l = gamma_l * jax.lax.rsqrt(var_l + EPS)
    shift_l = beta_l - mean_l * scale_l

    # ---- fused scale/shift + ReLU ----
    return jnp.maximum(acc * scale_l + shift_l, 0.0)


def double_conv_kernel(x_ref, bdw1_ref, bdw2_ref, pavg_ref,
                       g1_ref, beta1_ref, g2_ref, beta2_ref,
                       o_ref, hp1_ref, hp2_ref):
    N, H, _ = x_ref.shape
    WCout = o_ref.shape[1]
    pavg = pavg_ref[...]

    y1 = _conv_bn_relu_stage(x_ref[...], hp1_ref, bdw1_ref, pavg,
                             g1_ref[...], beta1_ref[...])
    # the intermediate activation stays on-chip (no HBM round trip)
    y2 = _conv_bn_relu_stage(y1.reshape(N, H, WCout), hp2_ref, bdw2_ref, pavg,
                             g2_ref[...], beta2_ref[...])
    o_ref[...] = y2                            # unmasked, 128-lane-dense store


def double_conv(x, params):
    """Forward of DoubleConv. Input/output are NCHW like the PyTorch module."""
    N, Cin, H, W = x.shape
    Cout = params["w1"].shape[0]
    f32 = jnp.float32

    # NCHW -> NHWC with (w, c) flattened onto the lane axis (lane-dense layout).
    x_flat = jnp.transpose(x, (0, 2, 3, 1)).reshape(N, H, W * Cin).astype(f32)

    # Banded conv weights: BDW[dh][u*C + c, v*Cout + o] = K[o, c, dh, u - v + 1]
    # for u - v + 1 in {0, 1, 2}, else 0.  This folds both the W-direction im2col
    # and the W zero-padding into the MXU weight operand.
    def banded(wk):
        co, ci = wk.shape[0], wk.shape[1]
        kt = jnp.transpose(wk.astype(f32), (2, 3, 1, 0))          # (dh, dw, ci, co)
        u = jnp.arange(W)[:, None, None]
        v = jnp.arange(W)[None, :, None]
        d = jnp.arange(3)[None, None, :]
        band = (u == v + d - 1).astype(f32)                       # (W, W, 3)
        bdw = jnp.einsum('uvd,hdco->hucvo', band, kt)             # (3, W, ci, W, co)
        return bdw.reshape(3, W * ci, W * co)

    # Per-channel pooling matrix: sums over w and replicates back over w,
    # with the 1/(N*H*W) normalization folded in.
    lane = jnp.arange(W * Cout)
    pavg = (lane[:, None] % Cout == lane[None, :] % Cout).astype(f32) / (N * H * W)

    def lane_tiled(p):
        return jnp.tile(p.reshape(1, Cout).astype(f32), (1, W))   # (1, W*Cout)

    out = pl.pallas_call(
        double_conv_kernel,
        out_shape=jax.ShapeDtypeStruct((N * H, W * Cout), f32),
        in_specs=[pl.BlockSpec(memory_space=pltpu.MemorySpace.VMEM)] * 8,
        out_specs=pl.BlockSpec(memory_space=pltpu.MemorySpace.VMEM),
        scratch_shapes=[
            pltpu.VMEM((N, H + 2, W * Cin), f32),    # H-halo for the input
            pltpu.VMEM((N, H + 2, W * Cout), f32),   # H-halo for the VMEM intermediate
        ],
        compiler_params=pltpu.CompilerParams(vmem_limit_bytes=32 * 1024 * 1024),
    )(x_flat, banded(params["w1"]), banded(params["w2"]), pavg,
      lane_tiled(params["g1"]), lane_tiled(params["beta1"]),
      lane_tiled(params["g2"]), lane_tiled(params["beta2"]))

    # (N*H, W*Cout) -> NCHW
    return jnp.transpose(out.reshape(N, H, W, Cout), (0, 3, 1, 2))


# ---------------- plain-JAX reference (correctness sanity check) ----------------
def ref_double_conv(x, params):
    def conv(x, w, b):
        y = jax.lax.conv_general_dilated(
            x, w, (1, 1), "SAME",
            dimension_numbers=("NCHW", "OIHW", "NCHW"),
            precision=jax.lax.Precision.HIGHEST)
        return y + b[None, :, None, None]

    def bn_relu(x, g, beta):
        mean = jnp.mean(x, axis=(0, 2, 3), keepdims=True)
        var = jnp.mean((x - mean) ** 2, axis=(0, 2, 3), keepdims=True)
        y = (x - mean) * jax.lax.rsqrt(var + EPS)
        y = y * g[None, :, None, None] + beta[None, :, None, None]
        return jnp.maximum(y, 0.0)

    y = bn_relu(conv(x, params["w1"], params["b1"]), params["g1"], params["beta1"])
    y = bn_relu(conv(y, params["w2"], params["b2"]), params["g2"], params["beta2"])
    return y


if __name__ == "__main__":
    # Shapes implied by the module: DoubleConv(in_ch=4, out_ch=8), x = (2, 4, 16, 16)
    N, Cin, Cout, H, W = 2, 4, 8, 16, 16
    key = jax.random.PRNGKey(0)
    ks = jax.random.split(key, 7)

    x = jax.random.normal(ks[0], (N, Cin, H, W), jnp.float32)

    def conv_init(k, cout, cin):
        kw, kb = jax.random.split(k)
        bound = 1.0 / np.sqrt(cin * 9)
        w = jax.random.uniform(kw, (cout, cin, 3, 3), jnp.float32, -bound, bound)
        b = jax.random.uniform(kb, (cout,), jnp.float32, -bound, bound)
        return w, b

    w1, b1 = conv_init(ks[1], Cout, Cin)
    w2, b2 = conv_init(ks[2], Cout, Cout)
    # conv biases b1/b2 are consumed only by the reference: under training-mode BN
    # they cancel exactly, so the kernel drops them (per the performance review).
    params = {
        "w1": w1, "b1": b1,
        "g1": 1.0 + 0.1 * jax.random.normal(ks[3], (Cout,), jnp.float32),
        "beta1": 0.1 * jax.random.normal(ks[4], (Cout,), jnp.float32),
        "w2": w2, "b2": b2,
        "g2": 1.0 + 0.1 * jax.random.normal(ks[5], (Cout,), jnp.float32),
        "beta2": 0.1 * jax.random.normal(ks[6], (Cout,), jnp.float32),
    }

    out = jax.jit(double_conv)(x, params)
    out = jax.block_until_ready(out)

    ref = ref_double_conv(x, params)
    assert out.shape == (N, Cout, H, W)
    np.testing.assert_allclose(np.asarray(out), np.asarray(ref), rtol=1e-4, atol=1e-4)

    print("KERNEL_OK")
</pallas_src>

<mosaic_0001>
module attributes {stable_mosaic.version = 11 : i64} {
  func.func @double_conv_kernel(%arg0: memref<2x16x64xf32, #tpu.memory_space<vmem>>, %arg1: memref<3x64x128xf32, #tpu.memory_space<vmem>>, %arg2: memref<3x128x128xf32, #tpu.memory_space<vmem>>, %arg3: memref<128x128xf32, #tpu.memory_space<vmem>>, %arg4: memref<1x128xf32, #tpu.memory_space<vmem>>, %arg5: memref<1x128xf32, #tpu.memory_space<vmem>>, %arg6: memref<1x128xf32, #tpu.memory_space<vmem>>, %arg7: memref<1x128xf32, #tpu.memory_space<vmem>>, %arg8: memref<32x128xf32, #tpu.memory_space<vmem>>, %arg9: memref<2x18x64xf32, #tpu.memory_space<vmem>>, %arg10: memref<2x18x128xf32, #tpu.memory_space<vmem>>) attributes {dimension_semantics = [], scalar_prefetch = 0 : i64, scratch_operands = 2 : i64, tpu.core_type = #tpu.core_type<tc>} {
    %c0 = arith.constant 0 : index
    %c0_0 = arith.constant 0 : index
    %0 = vector.load %arg3[%c0, %c0_0] : memref<128x128xf32, #tpu.memory_space<vmem>>, vector<128x128xf32>
    %c0_1 = arith.constant 0 : index
    %c0_2 = arith.constant 0 : index
    %c0_3 = arith.constant 0 : index
    %1 = vector.load %arg0[%c0_1, %c0_2, %c0_3] : memref<2x16x64xf32, #tpu.memory_space<vmem>>, vector<2x16x64xf32>
    %c0_4 = arith.constant 0 : index
    %c0_5 = arith.constant 0 : index
    %2 = vector.load %arg4[%c0_4, %c0_5] : memref<1x128xf32, #tpu.memory_space<vmem>>, vector<1x128xf32>
    %c0_6 = arith.constant 0 : index
    %c0_7 = arith.constant 0 : index
    %3 = vector.load %arg5[%c0_6, %c0_7] : memref<1x128xf32, #tpu.memory_space<vmem>>, vector<1x128xf32>
    %cst = arith.constant 0.000000e+00 : f32
    %4 = vector.broadcast %cst : f32 to vector<2x1x64xf32>
    %c0_8 = arith.constant 0 : index
    %c0_9 = arith.constant 0 : index
    %c0_10 = arith.constant 0 : index
    %5 = vector.load %arg9[%c0_8, %c0_9, %c0_10] : memref<2x18x64xf32, #tpu.memory_space<vmem>>, vector<2x1x64xf32>
    tpu.vector_store %arg9[%c0_8, %c0_9, %c0_10], %4 {strides = array<i32>} : memref<2x18x64xf32, #tpu.memory_space<vmem>>, vector<2x1x64xf32>,
    %cst_11 = arith.constant 0.000000e+00 : f32
    %6 = vector.broadcast %cst_11 : f32 to vector<2x1x64xf32>
    %c0_12 = arith.constant 0 : index
    %c17 = arith.constant 17 : index
    %c0_13 = arith.constant 0 : index
    %7 = vector.load %arg9[%c0_12, %c17, %c0_13] : memref<2x18x64xf32, #tpu.memory_space<vmem>>, vector<2x1x64xf32>
    tpu.vector_store %arg9[%c0_12, %c17, %c0_13], %6 {strides = array<i32>} : memref<2x18x64xf32, #tpu.memory_space<vmem>>, vector<2x1x64xf32>,
    %c0_14 = arith.constant 0 : index
    %c1 = arith.constant 1 : index
    %c0_15 = arith.constant 0 : index
    %8 = vector.load %arg9[%c0_14, %c1, %c0_15] : memref<2x18x64xf32, #tpu.memory_space<vmem>>, vector<2x16x64xf32>
    tpu.vector_store %arg9[%c0_14, %c1, %c0_15], %1 {strides = array<i32>} : memref<2x18x64xf32, #tpu.memory_space<vmem>>, vector<2x16x64xf32>,
    %c0_16 = arith.constant 0 : index
    %c0_17 = arith.constant 0 : index
    %c0_18 = arith.constant 0 : index
    %9 = vector.load %arg9[%c0_16, %c0_17, %c0_18] : memref<2x18x64xf32, #tpu.memory_space<vmem>>, vector<2x18x64xf32>
    %cst_19 = arith.constant 0.000000e+00 : f32
    %10 = vector.broadcast %cst_19 : f32 to vector<32x128xf32>
    %11 = vector.extract_strided_slice %9 {offsets = [0, 0, 0], sizes = [2, 16, 64], strides = [1, 1, 1]} : vector<2x18x64xf32> to vector<2x16x64xf32>
    %12 = vector.shape_cast %11 : vector<2x16x64xf32> to vector<32x64xf32>
    %c0_20 = arith.constant 0 : index
    %c0_21 = arith.constant 0 : index
    %c0_22 = arith.constant 0 : index
    %13 = vector.load %arg1[%c0_20, %c0_21, %c0_22] : memref<3x64x128xf32, #tpu.memory_space<vmem>>, vector<1x64x128xf32>
    %14 = vector.shape_cast %13 : vector<1x64x128xf32> to vector<64x128xf32>
    %cst_23 = arith.constant dense<0.000000e+00> : vector<32x128xf32>
    %15 = tpu.matmul %12, %14, %cst_23 {dimension_numbers = #tpu.dot_dimension_numbers<[1], [0], [0], [1], [0, 0, 1, 1], [], []>} : vector<32x64xf32>, vector<64x128xf32>, vector<32x128xf32> -> vector<32x128xf32>
    %16 = arith.addf %10, %15 : vector<32x128xf32>
    %17 = vector.extract_strided_slice %9 {offsets = [0, 1, 0], sizes = [2, 16, 64], strides = [1, 1, 1]} : vector<2x18x64xf32> to vector<2x16x64xf32>
    %18 = vector.shape_cast %17 : vector<2x16x64xf32> to vector<32x64xf32>
    %c1_24 = arith.constant 1 : index
    %c0_25 = arith.constant 0 : index
    %c0_26 = arith.constant 0 : index
    %19 = vector.load %arg1[%c1_24, %c0_25, %c0_26] : memref<3x64x128xf32, #tpu.memory_space<vmem>>, vector<1x64x128xf32>
    %20 = vector.shape_cast %19 : vector<1x64x128xf32> to vector<64x128xf32>
    %cst_27 = arith.constant dense<0.000000e+00> : vector<32x128xf32>
    %21 = tpu.matmul %18, %20, %cst_27 {dimension_numbers = #tpu.dot_dimension_numbers<[1], [0], [0], [1], [0, 0, 1, 1], [], []>} : vector<32x64xf32>, vector<64x128xf32>, vector<32x128xf32> -> vector<32x128xf32>
    %22 = arith.addf %16, %21 : vector<32x128xf32>
    %23 = vector.extract_strided_slice %9 {offsets = [0, 2, 0], sizes = [2, 16, 64], strides = [1, 1, 1]} : vector<2x18x64xf32> to vector<2x16x64xf32>
    %24 = vector.shape_cast %23 : vector<2x16x64xf32> to vector<32x64xf32>
    %c2 = arith.constant 2 : index
    %c0_28 = arith.constant 0 : index
    %c0_29 = arith.constant 0 : index
    %25 = vector.load %arg1[%c2, %c0_28, %c0_29] : memref<3x64x128xf32, #tpu.memory_space<vmem>>, vector<1x64x128xf32>
    %26 = vector.shape_cast %25 : vector<1x64x128xf32> to vector<64x128xf32>
    %cst_30 = arith.constant dense<0.000000e+00> : vector<32x128xf32>
    %27 = tpu.matmul %24, %26, %cst_30 {dimension_numbers = #tpu.dot_dimension_numbers<[1], [0], [0], [1], [0, 0, 1, 1], [], []>} : vector<32x64xf32>, vector<64x128xf32>, vector<32x128xf32> -> vector<32x128xf32>
    %28 = arith.addf %22, %27 : vector<32x128xf32>
    %cst_31 = arith.constant dense<0.000000e+00> : vector<128xf32>
    %29 = vector.multi_reduction <add>, %28, %cst_31 [0] : vector<32x128xf32> to vector<128xf32>
    %30 = vector.shape_cast %29 : vector<128xf32> to vector<1x128xf32>
    %31 = arith.mulf %28, %28 : vector<32x128xf32>
    %cst_32 = arith.constant dense<0.000000e+00> : vector<128xf32>
    %32 = vector.multi_reduction <add>, %31, %cst_32 [0] : vector<32x128xf32> to vector<128xf32>
    %33 = vector.shape_cast %32 : vector<128xf32> to vector<1x128xf32>
    %cst_33 = arith.constant dense<0.000000e+00> : vector<1x128xf32>
    %34 = tpu.matmul %30, %0, %cst_33 {dimension_numbers = #tpu.dot_dimension_numbers<[1], [0], [0], [1], [0, 0, 1, 1], [], []>} : vector<1x128xf32>, vector<128x128xf32>, vector<1x128xf32> -> vector<1x128xf32>
    %cst_34 = arith.constant dense<0.000000e+00> : vector<1x128xf32>
    %35 = tpu.matmul %33, %0, %cst_34 {dimension_numbers = #tpu.dot_dimension_numbers<[1], [0], [0], [1], [0, 0, 1, 1], [], []>} : vector<1x128xf32>, vector<128x128xf32>, vector<1x128xf32> -> vector<1x128xf32>
    %36 = arith.mulf %34, %34 : vector<1x128xf32>
    %37 = arith.subf %35, %36 : vector<1x128xf32>
    %cst_35 = arith.constant 9.99999974E-6 : f32
    %38 = vector.broadcast %cst_35 : f32 to vector<1x128xf32>
    %39 = arith.addf %37, %38 : vector<1x128xf32>
    %40 = math.rsqrt %39 : vector<1x128xf32>
    %41 = arith.mulf %2, %40 : vector<1x128xf32>
    %42 = arith.mulf %34, %41 : vector<1x128xf32>
    %43 = arith.subf %3, %42 : vector<1x128xf32>
    %44 = vector.broadcast %41 : vector<1x128xf32> to vector<32x128xf32>
    %45 = arith.mulf %28, %44 : vector<32x128xf32>
    %46 = vector.broadcast %43 : vector<1x128xf32> to vector<32x128xf32>
    %47 = arith.addf %45, %46 : vector<32x128xf32>
    %cst_36 = arith.constant 0.000000e+00 : f32
    %48 = vector.broadcast %cst_36 : f32 to vector<32x128xf32>
    %49 = arith.maximumf %47, %48 : vector<32x128xf32>
    %50 = vector.shape_cast %49 : vector<32x128xf32> to vector<2x16x128xf32>
    %c0_37 = arith.constant 0 : index
    %c0_38 = arith.constant 0 : index
    %51 = vector.load %arg6[%c0_37, %c0_38] : memref<1x128xf32, #tpu.memory_space<vmem>>, vector<1x128xf32>
    %c0_39 = arith.constant 0 : index
    %c0_40 = arith.constant 0 : index
    %52 = vector.load %arg7[%c0_39, %c0_40] : memref<1x128xf32, #tpu.memory_space<vmem>>, vector<1x128xf32>
    %cst_41 = arith.constant 0.000000e+00 : f32
    %53 = vector.broadcast %cst_41 : f32 to vector<2x1x128xf32>
    %c0_42 = arith.constant 0 : index
    %c0_43 = arith.constant 0 : index
    %c0_44 = arith.constant 0 : index
    %54 = vector.load %arg10[%c0_42, %c0_43, %c0_44] : memref<2x18x128xf32, #tpu.memory_space<vmem>>, vector<2x1x128xf32>
    tpu.vector_store %arg10[%c0_42, %c0_43, %c0_44], %53 {strides = array<i32>} : memref<2x18x128xf32, #tpu.memory_space<vmem>>, vector<2x1x128xf32>,
    %cst_45 = arith.constant 0.000000e+00 : f32
    %55 = vector.broadcast %cst_45 : f32 to vector<2x1x128xf32>
    %c0_46 = arith.constant 0 : index
    %c17_47 = arith.constant 17 : index
    %c0_48 = arith.constant 0 : index
    %56 = vector.load %arg10[%c0_46, %c17_47, %c0_48] : memref<2x18x128xf32, #tpu.memory_space<vmem>>, vector<2x1x128xf32>
    tpu.vector_store %arg10[%c0_46, %c17_47, %c0_48], %55 {strides = array<i32>} : memref<2x18x128xf32, #tpu.memory_space<vmem>>, vector<2x1x128xf32>,
    %c0_49 = arith.constant 0 : index
    %c1_50 = arith.constant 1 : index
    %c0_51 = arith.constant 0 : index
    %57 = vector.load %arg10[%c0_49, %c1_50, %c0_51] : memref<2x18x128xf32, #tpu.memory_space<vmem>>, vector<2x16x128xf32>
    tpu.vector_store %arg10[%c0_49, %c1_50, %c0_51], %50 {strides = array<i32>} : memref<2x18x128xf32, #tpu.memory_space<vmem>>, vector<2x16x128xf32>,
    %c0_52 = arith.constant 0 : index
    %c0_53 = arith.constant 0 : index
    %c0_54 = arith.constant 0 : index
    %58 = vector.load %arg10[%c0_52, %c0_53, %c0_54] : memref<2x18x128xf32, #tpu.memory_space<vmem>>, vector<2x18x128xf32>
    %cst_55 = arith.constant 0.000000e+00 : f32
    %59 = vector.broadcast %cst_55 : f32 to vector<32x128xf32>
    %60 = vector.extract_strided_slice %58 {offsets = [0, 0, 0], sizes = [2, 16, 128], strides = [1, 1, 1]} : vector<2x18x128xf32> to vector<2x16x128xf32>
    %61 = vector.shape_cast %60 : vector<2x16x128xf32> to vector<32x128xf32>
    %c0_56 = arith.constant 0 : index
    %c0_57 = arith.constant 0 : index
    %c0_58 = arith.constant 0 : index
    %62 = vector.load %arg2[%c0_56, %c0_57, %c0_58] : memref<3x128x128xf32, #tpu.memory_space<vmem>>, vector<1x128x128xf32>
    %63 = vector.shape_cast %62 : vector<1x128x128xf32> to vector<128x128xf32>
    %cst_59 = arith.constant dense<0.000000e+00> : vector<32x128xf32>
    %64 = tpu.matmul %61, %63, %cst_59 {dimension_numbers = #tpu.dot_dimension_numbers<[1], [0], [0], [1], [0, 0, 1, 1], [], []>} : vector<32x128xf32>, vector<128x128xf32>, vector<32x128xf32> -> vector<32x128xf32>
    %65 = arith.addf %59, %64 : vector<32x128xf32>
    %66 = vector.extract_strided_slice %58 {offsets = [0, 1, 0], sizes = [2, 16, 128], strides = [1, 1, 1]} : vector<2x18x128xf32> to vector<2x16x128xf32>
    %67 = vector.shape_cast %66 : vector<2x16x128xf32> to vector<32x128xf32>
    %c1_60 = arith.constant 1 : index
    %c0_61 = arith.constant 0 : index
    %c0_62 = arith.constant 0 : index
    %68 = vector.load %arg2[%c1_60, %c0_61, %c0_62] : memref<3x128x128xf32, #tpu.memory_space<vmem>>, vector<1x128x128xf32>
    %69 = vector.shape_cast %68 : vector<1x128x128xf32> to vector<128x128xf32>
    %cst_63 = arith.constant dense<0.000000e+00> : vector<32x128xf32>
    %70 = tpu.matmul %67, %69, %cst_63 {dimension_numbers = #tpu.dot_dimension_numbers<[1], [0], [0], [1], [0, 0, 1, 1], [], []>} : vector<32x128xf32>, vector<128x128xf32>, vector<32x128xf32> -> vector<32x128xf32>
    %71 = arith.addf %65, %70 : vector<32x128xf32>
    %72 = vector.extract_strided_slice %58 {offsets = [0, 2, 0], sizes = [2, 16, 128], strides = [1, 1, 1]} : vector<2x18x128xf32> to vector<2x16x128xf32>
    %73 = vector.shape_cast %72 : vector<2x16x128xf32> to vector<32x128xf32>
    %c2_64 = arith.constant 2 : index
    %c0_65 = arith.constant 0 : index
    %c0_66 = arith.constant 0 : index
    %74 = vector.load %arg2[%c2_64, %c0_65, %c0_66] : memref<3x128x128xf32, #tpu.memory_space<vmem>>, vector<1x128x128xf32>
    %75 = vector.shape_cast %74 : vector<1x128x128xf32> to vector<128x128xf32>
    %cst_67 = arith.constant dense<0.000000e+00> : vector<32x128xf32>
    %76 = tpu.matmul %73, %75, %cst_67 {dimension_numbers = #tpu.dot_dimension_numbers<[1], [0], [0], [1], [0, 0, 1, 1], [], []>} : vector<32x128xf32>, vector<128x128xf32>, vector<32x128xf32> -> vector<32x128xf32>
    %77 = arith.addf %71, %76 : vector<32x128xf32>
    %cst_68 = arith.constant dense<0.000000e+00> : vector<128xf32>
    %78 = vector.multi_reduction <add>, %77, %cst_68 [0] : vector<32x128xf32> to vector<128xf32>
    %79 = vector.shape_cast %78 : vector<128xf32> to vector<1x128xf32>
    %80 = arith.mulf %77, %77 : vector<32x128xf32>
    %cst_69 = arith.constant dense<0.000000e+00> : vector<128xf32>
    %81 = vector.multi_reduction <add>, %80, %cst_69 [0] : vector<32x128xf32> to vector<128xf32>
    %82 = vector.shape_cast %81 : vector<128xf32> to vector<1x128xf32>
    %cst_70 = arith.constant dense<0.000000e+00> : vector<1x128xf32>
    %83 = tpu.matmul %79, %0, %cst_70 {dimension_numbers = #tpu.dot_dimension_numbers<[1], [0], [0], [1], [0, 0, 1, 1], [], []>} : vector<1x128xf32>, vector<128x128xf32>, vector<1x128xf32> -> vector<1x128xf32>
    %cst_71 = arith.constant dense<0.000000e+00> : vector<1x128xf32>
    %84 = tpu.matmul %82, %0, %cst_71 {dimension_numbers = #tpu.dot_dimension_numbers<[1], [0], [0], [1], [0, 0, 1, 1], [], []>} : vector<1x128xf32>, vector<128x128xf32>, vector<1x128xf32> -> vector<1x128xf32>
    %85 = arith.mulf %83, %83 : vector<1x128xf32>
    %86 = arith.subf %84, %85 : vector<1x128xf32>
    %cst_72 = arith.constant 9.99999974E-6 : f32
    %87 = vector.broadcast %cst_72 : f32 to vector<1x128xf32>
    %88 = arith.addf %86, %87 : vector<1x128xf32>
    %89 = math.rsqrt %88 : vector<1x128xf32>
    %90 = arith.mulf %51, %89 : vector<1x128xf32>
    %91 = arith.mulf %83, %90 : vector<1x128xf32>
    %92 = arith.subf %52, %91 : vector<1x128xf32>
    %93 = vector.broadcast %90 : vector<1x128xf32> to vector<32x128xf32>
    %94 = arith.mulf %77, %93 : vector<32x128xf32>
    %95 = vector.broadcast %92 : vector<1x128xf32> to vector<32x128xf32>
    %96 = arith.addf %94, %95 : vector<32x128xf32>
    %cst_73 = arith.constant 0.000000e+00 : f32
    %97 = vector.broadcast %cst_73 : f32 to vector<32x128xf32>
    %98 = arith.maximumf %96, %97 : vector<32x128xf32>
    %c0_74 = arith.constant 0 : index
    %c0_75 = arith.constant 0 : index
    %99 = vector.load %arg8[%c0_74, %c0_75] : memref<32x128xf32, #tpu.memory_space<vmem>>, vector<32x128xf32>
    tpu.vector_store %arg8[%c0_74, %c0_75], %98 {strides = array<i32>} : memref<32x128xf32, #tpu.memory_space<vmem>>, vector<32x128xf32>,
    return
  }
}

</mosaic_0001>

<llo_original>
// kernel: double_conv.1
$region0: #{double_conv.1}
  #allocation0 [shape = 'u32[]', space=smem, size = 0x4, offset = 0x4, fixed_abs, tag = 'smem constant byte address 0x4 - core index']
  #allocation1 [shape = 'u32[144,128]{1,0:T(1,128)}', space=vmem, size = 0x12000, scoped, tag = 'internal scratch']
  #allocation2 [shape = 'f32[2,18,64]{2,1,0:T(8,128)}', space=vmem, size = 0x6000, scoped, tag = 'scratch operand']
  #allocation3 [shape = 'f32[2,18,128]{2,1,0:T(8,128)}', space=vmem, size = 0x6000, scoped, tag = 'scratch operand']
  %s0 = inlined_call_operand.vmem [shape: f32[2,16,64], index: 0, kind: input, shape index: {}]
  %s1 = inlined_call_operand.vmem [shape: f32[3,64,128], index: 1, kind: input, shape index: {}]
  %s2 = inlined_call_operand.vmem [shape: f32[3,128,128], index: 2, kind: input, shape index: {}]
  %s3 = inlined_call_operand.vmem [shape: f32[128,128], index: 3, kind: input, shape index: {}]
  %s4 = inlined_call_operand.vmem [shape: f32[1,128], index: 4, kind: input, shape index: {}]
  %s5 = inlined_call_operand.vmem [shape: f32[1,128], index: 5, kind: input, shape index: {}]
  %s6 = inlined_call_operand.vmem [shape: f32[1,128], index: 6, kind: input, shape index: {}]
  %s7 = inlined_call_operand.vmem [shape: f32[1,128], index: 7, kind: input, shape index: {}]
  %s8 = inlined_call_operand.vmem [shape: f32[32,128], index: 8, kind: output, shape index: {}]
  %s9 = sld [smem:[#allocation0]]
  $region42: #{double_conv.1} parent=0
    _
  %s11 = ssub.s32 1, %s9
  %s12 = scalar_select 0, %s11, %s9
  // Predicated region
  $region2: #{double_conv.1} parent=0 // pred_check
    _
  $region3: #{double_conv.1} parent=0 // pred_check_branch
    %14 = sbr.rel (0) target = $region5
  $region4: #{double_conv.1} parent=0 // pred_region
    _
  $region5: #{double_conv.1} parent=0 // pred_fallthru
    _
  // Predicated region
  $region6: #{double_conv.1} parent=0 // pred_check
    _
  $region7: #{double_conv.1} parent=0 // pred_check_branch
    %16 = sbr.rel (0) target = $region9
  $region8: #{double_conv.1} parent=0 // pred_region
    _
  $region9: #{double_conv.1} parent=0 // pred_fallthru
    _
  // Predicated region
  $region10: #{double_conv.1} parent=0 // pred_check
    _
  $region11: #{double_conv.1} parent=0 // pred_check_branch
    %18 = sbr.rel (0) target = $region13
  $region12: #{double_conv.1} parent=0 // pred_region
    _
  $region13: #{double_conv.1} parent=0 // pred_fallthru
    _
  // Predicated region
  $region14: #{double_conv.1} parent=0 // pred_check
    _
  $region15: #{double_conv.1} parent=0 // pred_check_branch
    %20 = sbr.rel (0) target = $region17
  $region16: #{double_conv.1} parent=0 // pred_region
    _
  $region17: #{double_conv.1} parent=0 // pred_fallthru
    _
  // Predicated region
  $region18: #{double_conv.1} parent=0 // pred_check
    _
  $region19: #{double_conv.1} parent=0 // pred_check_branch
    %22 = sbr.rel (0) target = $region21
  $region20: #{double_conv.1} parent=0 // pred_region
    _
  $region21: #{double_conv.1} parent=0 // pred_fallthru
    _
  // Predicated region
  $region22: #{double_conv.1} parent=0 // pred_check
    _
  $region23: #{double_conv.1} parent=0 // pred_check_branch
    %24 = sbr.rel (0) target = $region25
  $region24: #{double_conv.1} parent=0 // pred_region
    _
  $region25: #{double_conv.1} parent=0 // pred_fallthru
    _
  // Predicated region
  $region26: #{double_conv.1} parent=0 // pred_check
    _
  $region27: #{double_conv.1} parent=0 // pred_check_branch
    %26 = sbr.rel (0) target = $region29
  $region28: #{double_conv.1} parent=0 // pred_region
    _
  $region29: #{double_conv.1} parent=0 // pred_fallthru
    _
  // Predicated region
  $region30: #{double_conv.1} parent=0 // pred_check
    _
  $region31: #{double_conv.1} parent=0 // pred_check_branch
    %28 = sbr.rel (0) target = $region33
  $region32: #{double_conv.1} parent=0 // pred_region
    _
  $region33: #{double_conv.1} parent=0 // pred_fallthru
    _
  %v29 = vld [vmem:[%s3] sm:$0xff]
  %v30 = vld [vmem:[%s3 + $0x8] sm:$0xff]
  %v31 = vld [vmem:[%s3 + $0x10] sm:$0xff]
  %v32 = vld [vmem:[%s3 + $0x18] sm:$0xff]
  %v33 = vld [vmem:[%s3 + $0x20] sm:$0xff]
  %v34 = vld [vmem:[%s3 + $0x28] sm:$0xff]
  %v35 = vld [vmem:[%s3 + $0x30] sm:$0xff]
  %v36 = vld [vmem:[%s3 + $0x38] sm:$0xff]
  %v37 = vld [vmem:[%s3 + $0x40] sm:$0xff]
  %v38 = vld [vmem:[%s3 + $0x48] sm:$0xff]
  %v39 = vld [vmem:[%s3 + $0x50] sm:$0xff]
  %v40 = vld [vmem:[%s3 + $0x58] sm:$0xff]
  %v41 = vld [vmem:[%s3 + $0x60] sm:$0xff]
  %v42 = vld [vmem:[%s3 + $0x68] sm:$0xff]
  %v43 = vld [vmem:[%s3 + $0x70] sm:$0xff]
  %v44 = vld [vmem:[%s3 + $0x78] sm:$0xff]
  %v45 = vld [vmem:[%s0] sm:$0xff]
  %v46 = vld [vmem:[%s0 + $0x8] sm:$0xff]
  %v47 = vld [vmem:[%s0 + $0x10] sm:$0xff]
  %v48 = vld [vmem:[%s0 + $0x18] sm:$0xff]
  %v49 = vld [vmem:[%s4] sm:$0x1]
  %v50 = vld [vmem:[%s5] sm:$0x1]
  %vm51 = vcmask 516096
  %52 = vst.msk [vmem:[#allocation2] sm:$0x1] %vm51, 0.0
  %53 = vst.msk [vmem:[#allocation2 + $0x18] sm:$0x1] %vm51, 0.0
  %54 = vst.msk [vmem:[#allocation2 + $0x11] sm:$0x1] %vm51, 0.0
  %55 = vst.msk [vmem:[#allocation2 + $0x29] sm:$0x1] %vm51, 0.0
  %vm56 = vcmask 523264
  %57 = vst.msk [vmem:[#allocation2 + $0x1] sm:$0xff] %vm56, %v45
  %58 = vst.msk [vmem:[#allocation2 + $0x9] sm:$0xff] %vm56, %v46
  %59 = vst.msk [vmem:[#allocation2 + $0x19] sm:$0xff] %vm56, %v47
  %60 = vst.msk [vmem:[#allocation2 + $0x21] sm:$0xff] %vm56, %v48
  %v61 = vld [vmem:[#allocation2] sm:$0xff]
  %v62 = vld [vmem:[#allocation2 + $0x8] sm:$0xff]
  %v63 = vld [vmem:[#allocation2 + $0x10] sm:$0x3]
  %v64 = vld [vmem:[#allocation2 + $0x18] sm:$0xff]
  %v65 = vld [vmem:[#allocation2 + $0x20] sm:$0xff]
  %v66 = vld [vmem:[#allocation2 + $0x28] sm:$0x3]
  %v67 = vld [vmem:[%s1] sm:$0xff]
  %v68 = vld [vmem:[%s1 + $0x8] sm:$0xff]
  %v69 = vld [vmem:[%s1 + $0x10] sm:$0xff]
  %v70 = vld [vmem:[%s1 + $0x18] sm:$0xff]
  %v71 = vld [vmem:[%s1 + $0x20] sm:$0xff]
  %v72 = vld [vmem:[%s1 + $0x28] sm:$0xff]
  %v73 = vld [vmem:[%s1 + $0x30] sm:$0xff]
  %v74 = vld [vmem:[%s1 + $0x38] sm:$0xff]
  %vm81 = vcmask 1046528
  %v82 = vrot.slane %v61, 1
  %v83 = vrot.slane %v62, 1
  %v84 = vsel %vm81, %v82, %v83
  %v85 = vrot.slane %v63, 1
  %v86 = vsel %vm81, %v83, %v85
  %v87 = vrot.slane %v64, 1
  %v88 = vrot.slane %v65, 1
  %v89 = vsel %vm81, %v87, %v88
  %v90 = vrot.slane %v66, 1
  %v91 = vsel %vm81, %v88, %v90
  %s92 = scalar_lea.vmem %s1, 64
  %v93 = vld [vmem:[%s92] sm:$0xff]
  %v94 = vld [vmem:[%s92 + $0x8] sm:$0xff]
  %v95 = vld [vmem:[%s92 + $0x10] sm:$0xff]
  %v96 = vld [vmem:[%s92 + $0x18] sm:$0xff]
  %v97 = vld [vmem:[%s92 + $0x20] sm:$0xff]
  %v98 = vld [vmem:[%s92 + $0x28] sm:$0xff]
  %v99 = vld [vmem:[%s92 + $0x30] sm:$0xff]
  %v100 = vld [vmem:[%s92 + $0x38] sm:$0xff]
  %v101 = vsel %vm56, %v84, 0
  %v103 = vsel %vm56, %v86, 0
  %v105 = vsel %vm56, %v89, 0
  %v107 = vsel %vm56, %v91, 0
  %109 = vmatprep.subr.mxu0 0.0
  %110 = vmatpush1.msra.mxu0 %v93
  %111 = vmatprep.subr.mxu0 0.0
  %112 = vmatpush1.msra.mxu0 %v94
  %113 = vmatprep.subr.mxu0 0.0
  %114 = vmatpush1.msra.mxu0 %v95
  %115 = vmatprep.subr.mxu0 0.0
  %116 = vmatpush1.msra.mxu0 %v96
  %117 = vmatprep.subr.mxu0 0.0
  %118 = vmatpush1.msra.mxu0 %v97
  %119 = vmatprep.subr.mxu0 0.0
  %120 = vmatpush1.msra.mxu0 %v98
  %121 = vmatprep.subr.mxu0 0.0
  %122 = vmatpush1.msra.mxu0 %v99
  %123 = vmatprep.subr.mxu0 0.0
  %124 = vmatpush1.msra.mxu0 %v100
  %125 = vmatprep.subr.mxu0 0.0
  %126 = vmatpush1.msra.mxu0 0.0
  %127 = vmatprep.subr.mxu0 0.0
  %128 = vmatpush1.msra.mxu0 0.0
  %129 = vmatprep.subr.mxu0 0.0
  %130 = vmatpush1.msra.mxu0 0.0
  %131 = vmatprep.subr.mxu0 0.0
  %132 = vmatpush1.msra.mxu0 0.0
  %133 = vmatprep.subr.mxu0 0.0
  %134 = vmatpush1.msra.mxu0 0.0
  %135 = vmatprep.subr.mxu0 0.0
  %136 = vmatpush1.msra.mxu0 0.0
  %137 = vmatprep.subr.mxu0 0.0
  %138 = vmatpush1.msra.mxu0 0.0
  %139 = vmatprep.subr.mxu0 0.0
  %140 = vmatpush1.msra.mxu0 0.0
  %141 = vmatprep.subr.mxu0 0.0
  %142 = vmatpush1.msra.mxu0 0.0
  %143 = vmatprep.subr.mxu0 0.0
  %144 = vmatpush1.msra.mxu0 0.0
  %145 = vmatprep.subr.mxu0 0.0
  %146 = vmatpush1.msra.mxu0 0.0
  %147 = vmatprep.subr.mxu0 0.0
  %148 = vmatpush1.msra.mxu0 0.0
  %149 = vmatprep.subr.mxu0 0.0
  %150 = vmatpush1.msra.mxu0 0.0
  %151 = vmatprep.subr.mxu0 0.0
  %152 = vmatpush1.msra.mxu0 0.0
  %153 = vmatprep.subr.mxu0 0.0
  %154 = vmatpush1.msra.mxu0 0.0
  %155 = vmatprep.subr.mxu0 0.0
  %156 = vmatpush1.msra.mxu0 0.0
  %157 = vmatprep.subr.mxu0 0.0
  %158 = vmatpush1.msra.mxu0 0.0
  %159 = vmatprep.subr.mxu0 0.0
  %160 = vmatpush1.msra.mxu0 0.0
  %161 = vmatprep.subr.mxu0 0.0
  %162 = vmatpush1.msra.mxu0 0.0
  %163 = vmatprep.subr.mxu0 0.0
  %164 = vmatpush1.msra.mxu0 0.0
  %165 = vmatprep.subr.mxu0 0.0
  %166 = vmatpush1.msra.mxu0 0.0
  %167 = vmatprep.subr.mxu0 0.0
  %168 = vmatpush1.msra.mxu0 0.0
  %169 = vmatprep.subr.mxu0 0.0
  %170 = vmatpush1.msra.mxu0 0.0
  %171 = vmatprep.subr.mxu0 0.0
  %172 = vmatpush1.msra.mxu0 0.0
  %173 = vmatprep.mubr.f32.mxu0 0.0
  %174 = vmatmul.mubr.f32.gmra.mrb[0].mxu0 %v101
  %v175 = vpop.f32.mrb[0].mxu0
  %v176 = vadd.f32 0.0, %v175
  %v177 = vpop.f32.mrb[0].mxu0
  %178 = vmatprep.mubr.f32.mxu0 0.0
  %179 = vmatmul.mubr.f32.gmra.mrb[0].mxu0 %v103
  %v180 = vpop.f32.mrb[0].mxu0
  %v181 = vadd.f32 0.0, %v180
  %v182 = vpop.f32.mrb[0].mxu0
  %183 = vmatprep.mubr.f32.mxu0 0.0
  %184 = vmatmul.mubr.f32.gmra.mrb[0].mxu0 %v105
  %v185 = vpop.f32.mrb[0].mxu0
  %v186 = vadd.f32 0.0, %v185
  %v187 = vpop.f32.mrb[0].mxu0
  %188 = vmatprep.mubr.f32.mxu0 0.0
  %189 = vmatmul.mubr.f32.gmra.mrb[0].mxu0 %v107
  %v190 = vpop.f32.mrb[0].mxu0
  %v191 = vadd.f32 0.0, %v190
  %v192 = vpop.f32.mrb[0].mxu0
  %193 = vdwg.mxu0
  %v194 = vsel %vm56, %v61, 0
  %v196 = vsel %vm56, %v62, 0
  %v198 = vsel %vm56, %v64, 0
  %v200 = vsel %vm56, %v65, 0
  %202 = vmatprep.subr.mxu0 0.0
  %203 = vmatpush1.msra.mxu0 %v67
  %204 = vmatprep.subr.mxu0 0.0
  %205 = vmatpush1.msra.mxu0 %v68
  %206 = vmatprep.subr.mxu0 0.0
  %207 = vmatpush1.msra.mxu0 %v69
  %208 = vmatprep.subr.mxu0 0.0
  %209 = vmatpush1.msra.mxu0 %v70
  %210 = vmatprep.subr.mxu0 0.0
  %211 = vmatpush1.msra.mxu0 %v71
  %212 = vmatprep.subr.mxu0 0.0
  %213 = vmatpush1.msra.mxu0 %v72
  %214 = vmatprep.subr.mxu0 0.0
  %215 = vmatpush1.msra.mxu0 %v73
  %216 = vmatprep.subr.mxu0 0.0
  %217 = vmatpush1.msra.mxu0 %v74
  %218 = vmatprep.subr.mxu0 0.0
  %219 = vmatpush1.msra.mxu0 0.0
  %220 = vmatprep.subr.mxu0 0.0
  %221 = vmatpush1.msra.mxu0 0.0
  %222 = vmatprep.subr.mxu0 0.0
  %223 = vmatpush1.msra.mxu0 0.0
  %224 = vmatprep.subr.mxu0 0.0
  %225 = vmatpush1.msra.mxu0 0.0
  %226 = vmatprep.subr.mxu0 0.0
  %227 = vmatpush1.msra.mxu0 0.0
  %228 = vmatprep.subr.mxu0 0.0
  %229 = vmatpush1.msra.mxu0 0.0
  %230 = vmatprep.subr.mxu0 0.0
  %231 = vmatpush1.msra.mxu0 0.0
  %232 = vmatprep.subr.mxu0 0.0
  %233 = vmatpush1.msra.mxu0 0.0
  %234 = vmatprep.subr.mxu0 0.0
  %235 = vmatpush1.msra.mxu0 0.0
  %236 = vmatprep.subr.mxu0 0.0
  %237 = vmatpush1.msra.mxu0 0.0
  %238 = vmatprep.subr.mxu0 0.0
  %239 = vmatpush1.msra.mxu0 0.0
  %240 = vmatprep.subr.mxu0 0.0
  %241 = vmatpush1.msra.mxu0 0.0
  %242 = vmatprep.subr.mxu0 0.0
  %243 = vmatpush1.msra.mxu0 0.0
  %244 = vmatprep.subr.mxu0 0.0
  %245 = vmatpush1.msra.mxu0 0.0
  %246 = vmatprep.subr.mxu0 0.0
  %247 = vmatpush1.msra.mxu0 0.0
  %248 = vmatprep.subr.mxu0 0.0
  %249 = vmatpush1.msra.mxu0 0.0
  %250 = vmatprep.subr.mxu0 0.0
  %251 = vmatpush1.msra.mxu0 0.0
  %252 = vmatprep.subr.mxu0 0.0
  %253 = vmatpush1.msra.mxu0 0.0
  %254 = vmatprep.subr.mxu0 0.0
  %255 = vmatpush1.msra.mxu0 0.0
  %256 = vmatprep.subr.mxu0 0.0
  %257 = vmatpush1.msra.mxu0 0.0
  %258 = vmatprep.subr.mxu0 0.0
  %259 = vmatpush1.msra.mxu0 0.0
  %260 = vmatprep.subr.mxu0 0.0
  %261 = vmatpush1.msra.mxu0 0.0
  %262 = vmatprep.subr.mxu0 0.0
  %263 = vmatpush1.msra.mxu0 0.0
  %264 = vmatprep.subr.mxu0 0.0
  %265 = vmatpush1.msra.mxu0 0.0
  %266 = vmatprep.mubr.f32.mxu0 0.0
  %267 = vmatmul.mubr.f32.gmra.mrb[0].mxu0 %v194
  %v268 = vpop.f32.mrb[0].mxu0
  %v269 = vadd.f32 %v176, %v268
  %v270 = vpop.f32.mrb[0].mxu0
  %271 = vmatprep.mubr.f32.mxu0 0.0
  %272 = vmatmul.mubr.f32.gmra.mrb[0].mxu0 %v196
  %v273 = vpop.f32.mrb[0].mxu0
  %v274 = vadd.f32 %v181, %v273
  %v275 = vpop.f32.mrb[0].mxu0
  %276 = vmatprep.mubr.f32.mxu0 0.0
  %277 = vmatmul.mubr.f32.gmra.mrb[0].mxu0 %v198
  %v278 = vpop.f32.mrb[0].mxu0
  %v279 = vadd.f32 %v186, %v278
  %v280 = vpop.f32.mrb[0].mxu0
  %281 = vmatprep.mubr.f32.mxu0 0.0
  %282 = vmatmul.mubr.f32.gmra.mrb[0].mxu0 %v200
  %v283 = vpop.f32.mrb[0].mxu0
  %v284 = vadd.f32 %v191, %v283
  %v285 = vpop.f32.mrb[0].mxu0
  %286 = vdwg.mxu0
  %vm287 = vcmask 1045504
  %v288 = vrot.slane %v61, 2
  %v289 = vrot.slane %v62, 2
  %v290 = vsel %vm287, %v288, %v289
  %v291 = vrot.slane %v63, 2
  %v292 = vsel %vm287, %v289, %v291
  %v293 = vrot.slane %v64, 2
  %v294 = vrot.slane %v65, 2
  %v295 = vsel %vm287, %v293, %v294
  %v296 = vrot.slane %v66, 2
  %v297 = vsel %vm287, %v294, %v296
  %s298 = scalar_lea.vmem %s1, 128
  %v299 = vld [vmem:[%s298] sm:$0xff]
  %v300 = vld [vmem:[%s298 + $0x8] sm:$0xff]
  %v301 = vld [vmem:[%s298 + $0x10] sm:$0xff]
  %v302 = vld [vmem:[%s298 + $0x18] sm:$0xff]
  %v303 = vld [vmem:[%s298 + $0x20] sm:$0xff]
  %v304 = vld [vmem:[%s298 + $0x28] sm:$0xff]
  %v305 = vld [vmem:[%s298 + $0x30] sm:$0xff]
  %v306 = vld [vmem:[%s298 + $0x38] sm:$0xff]
  %v307 = vsel %vm56, %v290, 0
  %v309 = vsel %vm56, %v292, 0
  %v311 = vsel %vm56, %v295, 0
  %v313 = vsel %vm56, %v297, 0
  %315 = vmatprep.subr.mxu0 0.0
  %316 = vmatpush1.msra.mxu0 %v299
  %317 = vmatprep.subr.mxu0 0.0
  %318 = vmatpush1.msra.mxu0 %v300
  %319 = vmatprep.subr.mxu0 0.0
  %320 = vmatpush1.msra.mxu0 %v301
  %321 = vmatprep.subr.mxu0 0.0
  %322 = vmatpush1.msra.mxu0 %v302
  %323 = vmatprep.subr.mxu0 0.0
  %324 = vmatpush1.msra.mxu0 %v303
  %325 = vmatprep.subr.mxu0 0.0
  %326 = vmatpush1.msra.mxu0 %v304
  %327 = vmatprep.subr.mxu0 0.0
  %328 = vmatpush1.msra.mxu0 %v305
  %329 = vmatprep.subr.mxu0 0.0
  %330 = vmatpush1.msra.mxu0 %v306
  %331 = vmatprep.subr.mxu0 0.0
  %332 = vmatpush1.msra.mxu0 0.0
  %333 = vmatprep.subr.mxu0 0.0
  %334 = vmatpush1.msra.mxu0 0.0
  %335 = vmatprep.subr.mxu0 0.0
  %336 = vmatpush1.msra.mxu0 0.0
  %337 = vmatprep.subr.mxu0 0.0
  %338 = vmatpush1.msra.mxu0 0.0
  %339 = vmatprep.subr.mxu0 0.0
  %340 = vmatpush1.msra.mxu0 0.0
  %341 = vmatprep.subr.mxu0 0.0
  %342 = vmatpush1.msra.mxu0 0.0
  %343 = vmatprep.subr.mxu0 0.0
  %344 = vmatpush1.msra.mxu0 0.0
  %345 = vmatprep.subr.mxu0 0.0
  %346 = vmatpush1.msra.mxu0 0.0
  %347 = vmatprep.subr.mxu0 0.0
  %348 = vmatpush1.msra.mxu0 0.0
  %349 = vmatprep.subr.mxu0 0.0
  %350 = vmatpush1.msra.mxu0 0.0
  %351 = vmatprep.subr.mxu0 0.0
  %352 = vmatpush1.msra.mxu0 0.0
  %353 = vmatprep.subr.mxu0 0.0
  %354 = vmatpush1.msra.mxu0 0.0
  %355 = vmatprep.subr.mxu0 0.0
  %356 = vmatpush1.msra.mxu0 0.0
  %357 = vmatprep.subr.mxu0 0.0
  %358 = vmatpush1.msra.mxu0 0.0
  %359 = vmatprep.subr.mxu0 0.0
  %360 = vmatpush1.msra.mxu0 0.0
  %361 = vmatprep.subr.mxu0 0.0
  %362 = vmatpush1.msra.mxu0 0.0
  %363 = vmatprep.subr.mxu0 0.0
  %364 = vmatpush1.msra.mxu0 0.0
  %365 = vmatprep.subr.mxu0 0.0
  %366 = vmatpush1.msra.mxu0 0.0
  %367 = vmatprep.subr.mxu0 0.0
  %368 = vmatpush1.msra.mxu0 0.0
  %369 = vmatprep.subr.mxu0 0.0
  %370 = vmatpush1.msra.mxu0 0.0
  %371 = vmatprep.subr.mxu0 0.0
  %372 = vmatpush1.msra.mxu0 0.0
  %373 = vmatprep.subr.mxu0 0.0
  %374 = vmatpush1.msra.mxu0 0.0
  %375 = vmatprep.subr.mxu0 0.0
  %376 = vmatpush1.msra.mxu0 0.0
  %377 = vmatprep.subr.mxu0 0.0
  %378 = vmatpush1.msra.mxu0 0.0
  %379 = vmatprep.mubr.f32.mxu0 0.0
  %380 = vmatmul.mubr.f32.gmra.mrb[0].mxu0 %v307
  %v381 = vpop.f32.mrb[0].mxu0
  %v382 = vadd.f32 0.0, %v381
  %v383 = vpop.f32.mrb[0].mxu0
  %384 = vmatprep.mubr.f32.mxu0 0.0
  %385 = vmatmul.mubr.f32.gmra.mrb[0].mxu0 %v309
  %v386 = vpop.f32.mrb[0].mxu0
  %v387 = vadd.f32 0.0, %v386
  %v388 = vpop.f32.mrb[0].mxu0
  %389 = vmatprep.mubr.f32.mxu0 0.0
  %390 = vmatmul.mubr.f32.gmra.mrb[0].mxu0 %v311
  %v391 = vpop.f32.mrb[0].mxu0
  %v392 = vadd.f32 0.0, %v391
  %v393 = vpop.f32.mrb[0].mxu0
  %394 = vmatprep.mubr.f32.mxu0 0.0
  %395 = vmatmul.mubr.f32.gmra.mrb[0].mxu0 %v313
  %v396 = vpop.f32.mrb[0].mxu0
  %v397 = vadd.f32 0.0, %v396
  %v398 = vpop.f32.mrb[0].mxu0
  %399 = vdwg.mxu0
  %v400 = vadd.f32 %v269, %v382
  %v401 = vadd.f32 %v274, %v387
  %v402 = vadd.f32 %v279, %v392
  %v403 = vadd.f32 %v284, %v397
  %v404 = vadd.f32 %v400, %v401
  %v405 = vadd.f32 %v404, %v402
  %v406 = vadd.f32 %v405, %v403
  %v407 = vrot.slane %v406, 4
  %v408 = vadd.f32 %v406, %v407
  %v409 = vrot.slane %v408, 2
  %v410 = vadd.f32 %v408, %v409
  %v411 = vrot.slane %v410, 1
  %v412 = vadd.f32 %v410, %v411
  %v413 = vmul.f32 %v400, %v400
  %v414 = vmul.f32 %v401, %v401
  %v415 = vmul.f32 %v402, %v402
  %v416 = vmul.f32 %v403, %v403
  %v417 = vadd.f32 %v413, %v414
  %v418 = vadd.f32 %v417, %v415
  %v419 = vadd.f32 %v418, %v416
  %v420 = vrot.slane %v419, 4
  %v421 = vadd.f32 %v419, %v420
  %v422 = vrot.slane %v421, 2
  %v423 = vadd.f32 %v421, %v422
  %v424 = vrot.slane %v423, 1
  %v425 = vadd.f32 %v423, %v424
  %426 = vmatprep.subr.mxu0 0.0
  %427 = vmatpush1.msra.mxu0 %v29
  %428 = vmatprep.subr.mxu0 0.0
  %429 = vmatpush1.msra.mxu0 %v30
  %430 = vmatprep.subr.mxu0 0.0
  %431 = vmatpush1.msra.mxu0 %v31
  %432 = vmatprep.subr.mxu0 0.0
  %433 = vmatpush1.msra.mxu0 %v32
  %434 = vmatprep.subr.mxu0 0.0
  %435 = vmatpush1.msra.mxu0 %v33
  %436 = vmatprep.subr.mxu0 0.0
  %437 = vmatpush1.msra.mxu0 %v34
  %438 = vmatprep.subr.mxu0 0.0
  %439 = vmatpush1.msra.mxu0 %v35
  %440 = vmatprep.subr.mxu0 0.0
  %441 = vmatpush1.msra.mxu0 %v36
  %442 = vmatprep.subr.mxu0 0.0
  %443 = vmatpush1.msra.mxu0 %v37
  %444 = vmatprep.subr.mxu0 0.0
  %445 = vmatpush1.msra.mxu0 %v38
  %446 = vmatprep.subr.mxu0 0.0
  %447 = vmatpush1.msra.mxu0 %v39
  %448 = vmatprep.subr.mxu0 0.0
  %449 = vmatpush1.msra.mxu0 %v40
  %450 = vmatprep.subr.mxu0 0.0
  %451 = vmatpush1.msra.mxu0 %v41
  %452 = vmatprep.subr.mxu0 0.0
  %453 = vmatpush1.msra.mxu0 %v42
  %454 = vmatprep.subr.mxu0 0.0
  %455 = vmatpush1.msra.mxu0 %v43
  %456 = vmatprep.subr.mxu0 0.0
  %457 = vmatpush1.msra.mxu0 %v44
  %458 = vmatprep.subr.mxu0 0.0
  %459 = vmatpush1.msra.mxu0 0.0
  %460 = vmatprep.subr.mxu0 0.0
  %461 = vmatpush1.msra.mxu0 0.0
  %462 = vmatprep.subr.mxu0 0.0
  %463 = vmatpush1.msra.mxu0 0.0
  %464 = vmatprep.subr.mxu0 0.0
  %465 = vmatpush1.msra.mxu0 0.0
  %466 = vmatprep.subr.mxu0 0.0
  %467 = vmatpush1.msra.mxu0 0.0
  %468 = vmatprep.subr.mxu0 0.0
  %469 = vmatpush1.msra.mxu0 0.0
  %470 = vmatprep.subr.mxu0 0.0
  %471 = vmatpush1.msra.mxu0 0.0
  %472 = vmatprep.subr.mxu0 0.0
  %473 = vmatpush1.msra.mxu0 0.0
  %474 = vmatprep.subr.mxu0 0.0
  %475 = vmatpush1.msra.mxu0 0.0
  %476 = vmatprep.subr.mxu0 0.0
  %477 = vmatpush1.msra.mxu0 0.0
  %478 = vmatprep.subr.mxu0 0.0
  %479 = vmatpush1.msra.mxu0 0.0
  %480 = vmatprep.subr.mxu0 0.0
  %481 = vmatpush1.msra.mxu0 0.0
  %482 = vmatprep.subr.mxu0 0.0
  %483 = vmatpush1.msra.mxu0 0.0
  %484 = vmatprep.subr.mxu0 0.0
  %485 = vmatpush1.msra.mxu0 0.0
  %486 = vmatprep.subr.mxu0 0.0
  %487 = vmatpush1.msra.mxu0 0.0
  %488 = vmatprep.subr.mxu0 0.0
  %489 = vmatpush1.msra.mxu0 0.0
  %490 = vmatprep.mubr.f32.mxu0 0.0
  %491 = vmatmul.mubr.f32.gmra.mrb[0].mxu0 %v412
  %v492 = vpop.f32.mrb[0].mxu0
  %v493 = vadd.f32 0.0, %v492
  %v494 = vpop.f32.mrb[0].mxu0
  %495 = vdwg.mxu0
  %496 = vmatprep.subr.mxu0 0.0
  %497 = vmatpush1.msra.mxu0 %v29
  %498 = vmatprep.subr.mxu0 0.0
  %499 = vmatpush1.msra.mxu0 %v30
  %500 = vmatprep.subr.mxu0 0.0
  %501 = vmatpush1.msra.mxu0 %v31
  %502 = vmatprep.subr.mxu0 0.0
  %503 = vmatpush1.msra.mxu0 %v32
  %504 = vmatprep.subr.mxu0 0.0
  %505 = vmatpush1.msra.mxu0 %v33
  %506 = vmatprep.subr.mxu0 0.0
  %507 = vmatpush1.msra.mxu0 %v34
  %508 = vmatprep.subr.mxu0 0.0
  %509 = vmatpush1.msra.mxu0 %v35
  %510 = vmatprep.subr.mxu0 0.0
  %511 = vmatpush1.msra.mxu0 %v36
  %512 = vmatprep.subr.mxu0 0.0
  %513 = vmatpush1.msra.mxu0 %v37
  %514 = vmatprep.subr.mxu0 0.0
  %515 = vmatpush1.msra.mxu0 %v38
  %516 = vmatprep.subr.mxu0 0.0
  %517 = vmatpush1.msra.mxu0 %v39
  %518 = vmatprep.subr.mxu0 0.0
  %519 = vmatpush1.msra.mxu0 %v40
  %520 = vmatprep.subr.mxu0 0.0
  %521 = vmatpush1.msra.mxu0 %v41
  %522 = vmatprep.subr.mxu0 0.0
  %523 = vmatpush1.msra.mxu0 %v42
  %524 = vmatprep.subr.mxu0 0.0
  %525 = vmatpush1.msra.mxu0 %v43
  %526 = vmatprep.subr.mxu0 0.0
  %527 = vmatpush1.msra.mxu0 %v44
  %528 = vmatprep.subr.mxu0 0.0
  %529 = vmatpush1.msra.mxu0 0.0
  %530 = vmatprep.subr.mxu0 0.0
  %531 = vmatpush1.msra.mxu0 0.0
  %532 = vmatprep.subr.mxu0 0.0
  %533 = vmatpush1.msra.mxu0 0.0
  %534 = vmatprep.subr.mxu0 0.0
  %535 = vmatpush1.msra.mxu0 0.0
  %536 = vmatprep.subr.mxu0 0.0
  %537 = vmatpush1.msra.mxu0 0.0
  %538 = vmatprep.subr.mxu0 0.0
  %539 = vmatpush1.msra.mxu0 0.0
  %540 = vmatprep.subr.mxu0 0.0
  %541 = vmatpush1.msra.mxu0 0.0
  %542 = vmatprep.subr.mxu0 0.0
  %543 = vmatpush1.msra.mxu0 0.0
  %544 = vmatprep.subr.mxu0 0.0
  %545 = vmatpush1.msra.mxu0 0.0
  %546 = vmatprep.subr.mxu0 0.0
  %547 = vmatpush1.msra.mxu0 0.0
  %548 = vmatprep.subr.mxu0 0.0
  %549 = vmatpush1.msra.mxu0 0.0
  %550 = vmatprep.subr.mxu0 0.0
  %551 = vmatpush1.msra.mxu0 0.0
  %552 = vmatprep.subr.mxu0 0.0
  %553 = vmatpush1.msra.mxu0 0.0
  %554 = vmatprep.subr.mxu0 0.0
  %555 = vmatpush1.msra.mxu0 0.0
  %556 = vmatprep.subr.mxu0 0.0
  %557 = vmatpush1.msra.mxu0 0.0
  %558 = vmatprep.subr.mxu0 0.0
  %559 = vmatpush1.msra.mxu0 0.0
  %560 = vmatprep.mubr.f32.mxu0 0.0
  %561 = vmatmul.mubr.f32.gmra.mrb[0].mxu0 %v425
  %v562 = vpop.f32.mrb[0].mxu0
  %v563 = vadd.f32 0.0, %v562
  %v564 = vpop.f32.mrb[0].mxu0
  %565 = vdwg.mxu0
  %v566 = vmul.f32 %v493, %v493
  %v567 = vsub.f32 %v563, %v566
  %v568 = vadd.f32 %v567, 1e-05
  %v569 = vrsqrt.pop %v568
  %v570 = vmul.f32 %v49, %v569
  %v571 = vmul.f32 %v493, %v570
  %v572 = vsub.f32 %v50, %v571
  %v574 = vlaneseq
  %v575 = vshrl.u32 %v574, 7
  %v576 = vsub.s32 0, %v575
  %v577 = vrot.slane %v570, %v576
  %v579 = vmul.f32 %v400, %v577
  %v580 = vmul.f32 %v401, %v577
  %v581 = vmul.f32 %v402, %v577
  %v582 = vmul.f32 %v403, %v577
  %v584 = vlaneseq
  %v585 = vshrl.u32 %v584, 7
  %v586 = vsub.s32 0, %v585
  %v587 = vrot.slane %v572, %v586
  %v589 = vadd.f32 %v579, %v587
  %v590 = vadd.f32 %v580, %v587
  %v591 = vadd.f32 %v581, %v587
  %v592 = vadd.f32 %v582, %v587
  %v593 = vmax.f32 %v589, 0.0
  %v594 = vmax.f32 %v590, 0.0
  %v595 = vmax.f32 %v591, 0.0
  %v596 = vmax.f32 %v592, 0.0
  %v597 = vld [vmem:[%s6] sm:$0x1]
  %v598 = vld [vmem:[%s7] sm:$0x1]
  %599 = vst [vmem:[#allocation3] sm:$0x1] 0.0
  %600 = vst [vmem:[#allocation3 + $0x18] sm:$0x1] 0.0
  %601 = vst [vmem:[#allocation3 + $0x11] sm:$0x1] 0.0
  %602 = vst [vmem:[#allocation3 + $0x29] sm:$0x1] 0.0
  %603 = vst [vmem:[#allocation3 + $0x1] sm:$0xff] %v593
  %604 = vst [vmem:[#allocation3 + $0x9] sm:$0xff] %v594
  %605 = vst [vmem:[#allocation3 + $0x19] sm:$0xff] %v595
  %606 = vst [vmem:[#allocation3 + $0x21] sm:$0xff] %v596
  %v607 = vld [vmem:[#allocation3] sm:$0xff]
  %v608 = vld [vmem:[#allocation3 + $0x8] sm:$0xff]
  %v609 = vld [vmem:[#allocation3 + $0x10] sm:$0x3]
  %v610 = vld [vmem:[#allocation3 + $0x18] sm:$0xff]
  %v611 = vld [vmem:[#allocation3 + $0x20] sm:$0xff]
  %v612 = vld [vmem:[#allocation3 + $0x28] sm:$0x3]
  %v613 = vld [vmem:[%s2] sm:$0xff]
  %v614 = vld [vmem:[%s2 + $0x8] sm:$0xff]
  %v615 = vld [vmem:[%s2 + $0x10] sm:$0xff]
  %v616 = vld [vmem:[%s2 + $0x18] sm:$0xff]
  %v617 = vld [vmem:[%s2 + $0x20] sm:$0xff]
  %v618 = vld [vmem:[%s2 + $0x28] sm:$0xff]
  %v619 = vld [vmem:[%s2 + $0x30] sm:$0xff]
  %v620 = vld [vmem:[%s2 + $0x38] sm:$0xff]
  %v621 = vld [vmem:[%s2 + $0x40] sm:$0xff]
  %v622 = vld [vmem:[%s2 + $0x48] sm:$0xff]
  %v623 = vld [vmem:[%s2 + $0x50] sm:$0xff]
  %v624 = vld [vmem:[%s2 + $0x58] sm:$0xff]
  %v625 = vld [vmem:[%s2 + $0x60] sm:$0xff]
  %v626 = vld [vmem:[%s2 + $0x68] sm:$0xff]
  %v627 = vld [vmem:[%s2 + $0x70] sm:$0xff]
  %v628 = vld [vmem:[%s2 + $0x78] sm:$0xff]
  %v635 = vrot.slane %v607, 1
  %v636 = vrot.slane %v608, 1
  %v637 = vsel %vm81, %v635, %v636
  %v638 = vrot.slane %v609, 1
  %v639 = vsel %vm81, %v636, %v638
  %v640 = vrot.slane %v610, 1
  %v641 = vrot.slane %v611, 1
  %v642 = vsel %vm81, %v640, %v641
  %v643 = vrot.slane %v612, 1
  %v644 = vsel %vm81, %v641, %v643
  %s649 = scalar_lea.vmem %s2, 128
  %v650 = vld [vmem:[%s649] sm:$0xff]
  %v651 = vld [vmem:[%s649 + $0x8] sm:$0xff]
  %v652 = vld [vmem:[%s649 + $0x10] sm:$0xff]
  %v653 = vld [vmem:[%s649 + $0x18] sm:$0xff]
  %v654 = vld [vmem:[%s649 + $0x20] sm:$0xff]
  %v655 = vld [vmem:[%s649 + $0x28] sm:$0xff]
  %v656 = vld [vmem:[%s649 + $0x30] sm:$0xff]
  %v657 = vld [vmem:[%s649 + $0x38] sm:$0xff]
  %v658 = vld [vmem:[%s649 + $0x40] sm:$0xff]
  %v659 = vld [vmem:[%s649 + $0x48] sm:$0xff]
  %v660 = vld [vmem:[%s649 + $0x50] sm:$0xff]
  %v661 = vld [vmem:[%s649 + $0x58] sm:$0xff]
  %v662 = vld [vmem:[%s649 + $0x60] sm:$0xff]
  %v663 = vld [vmem:[%s649 + $0x68] sm:$0xff]
  %v664 = vld [vmem:[%s649 + $0x70] sm:$0xff]
  %v665 = vld [vmem:[%s649 + $0x78] sm:$0xff]
  %666 = vmatprep.subr.mxu0 0.0
  %667 = vmatpush1.msra.mxu0 %v650
  %668 = vmatprep.subr.mxu0 0.0
  %669 = vmatpush1.msra.mxu0 %v651
  %670 = vmatprep.subr.mxu0 0.0
  %671 = vmatpush1.msra.mxu0 %v652
  %672 = vmatprep.subr.mxu0 0.0
  %673 = vmatpush1.msra.mxu0 %v653
  %674 = vmatprep.subr.mxu0 0.0
  %675 = vmatpush1.msra.mxu0 %v654
  %676 = vmatprep.subr.mxu0 0.0
  %677 = vmatpush1.msra.mxu0 %v655
  %678 = vmatprep.subr.mxu0 0.0
  %679 = vmatpush1.msra.mxu0 %v656
  %680 = vmatprep.subr.mxu0 0.0
  %681 = vmatpush1.msra.mxu0 %v657
  %682 = vmatprep.subr.mxu0 0.0
  %683 = vmatpush1.msra.mxu0 %v658
  %684 = vmatprep.subr.mxu0 0.0
  %685 = vmatpush1.msra.mxu0 %v659
  %686 = vmatprep.subr.mxu0 0.0
  %687 = vmatpush1.msra.mxu0 %v660
  %688 = vmatprep.subr.mxu0 0.0
  %689 = vmatpush1.msra.mxu0 %v661
  %690 = vmatprep.subr.mxu0 0.0
  %691 = vmatpush1.msra.mxu0 %v662
  %692 = vmatprep.subr.mxu0 0.0
  %693 = vmatpush1.msra.mxu0 %v663
  %694 = vmatprep.subr.mxu0 0.0
  %695 = vmatpush1.msra.mxu0 %v664
  %696 = vmatprep.subr.mxu0 0.0
  %697 = vmatpush1.msra.mxu0 %v665
  %698 = vmatprep.subr.mxu0 0.0
  %699 = vmatpush1.msra.mxu0 0.0
  %700 = vmatprep.subr.mxu0 0.0
  %701 = vmatpush1.msra.mxu0 0.0
  %702 = vmatprep.subr.mxu0 0.0
  %703 = vmatpush1.msra.mxu0 0.0
  %704 = vmatprep.subr.mxu0 0.0
  %705 = vmatpush1.msra.mxu0 0.0
  %706 = vmatprep.subr.mxu0 0.0
  %707 = vmatpush1.msra.mxu0 0.0
  %708 = vmatprep.subr.mxu0 0.0
  %709 = vmatpush1.msra.mxu0 0.0
  %710 = vmatprep.subr.mxu0 0.0
  %711 = vmatpush1.msra.mxu0 0.0
  %712 = vmatprep.subr.mxu0 0.0
  %713 = vmatpush1.msra.mxu0 0.0
  %714 = vmatprep.subr.mxu0 0.0
  %715 = vmatpush1.msra.mxu0 0.0
  %716 = vmatprep.subr.mxu0 0.0
  %717 = vmatpush1.msra.mxu0 0.0
  %718 = vmatprep.subr.mxu0 0.0
  %719 = vmatpush1.msra.mxu0 0.0
  %720 = vmatprep.subr.mxu0 0.0
  %721 = vmatpush1.msra.mxu0 0.0
  %722 = vmatprep.subr.mxu0 0.0
  %723 = vmatpush1.msra.mxu0 0.0
  %724 = vmatprep.subr.mxu0 0.0
  %725 = vmatpush1.msra.mxu0 0.0
  %726 = vmatprep.subr.mxu0 0.0
  %727 = vmatpush1.msra.mxu0 0.0
  %728 = vmatprep.subr.mxu0 0.0
  %729 = vmatpush1.msra.mxu0 0.0
  %730 = vmatprep.mubr.f32.mxu0 0.0
  %731 = vmatmul.mubr.f32.gmra.mrb[0].mxu0 %v637
  %v732 = vpop.f32.mrb[0].mxu0
  %v733 = vadd.f32 0.0, %v732
  %v734 = vpop.f32.mrb[0].mxu0
  %735 = vmatprep.mubr.f32.mxu0 0.0
  %736 = vmatmul.mubr.f32.gmra.mrb[0].mxu0 %v639
  %v737 = vpop.f32.mrb[0].mxu0
  %v738 = vadd.f32 0.0, %v737
  %v739 = vpop.f32.mrb[0].mxu0
  %740 = vmatprep.mubr.f32.mxu0 0.0
  %741 = vmatmul.mubr.f32.gmra.mrb[0].mxu0 %v642
  %v742 = vpop.f32.mrb[0].mxu0
  %v743 = vadd.f32 0.0, %v742
  %v744 = vpop.f32.mrb[0].mxu0
  %745 = vmatprep.mubr.f32.mxu0 0.0
  %746 = vmatmul.mubr.f32.gmra.mrb[0].mxu0 %v644
  %v747 = vpop.f32.mrb[0].mxu0
  %v748 = vadd.f32 0.0, %v747
  %v749 = vpop.f32.mrb[0].mxu0
  %750 = vdwg.mxu0
  %751 = vmatprep.subr.mxu0 0.0
  %752 = vmatpush1.msra.mxu0 %v613
  %753 = vmatprep.subr.mxu0 0.0
  %754 = vmatpush1.msra.mxu0 %v614
  %755 = vmatprep.subr.mxu0 0.0
  %756 = vmatpush1.msra.mxu0 %v615
  %757 = vmatprep.subr.mxu0 0.0
  %758 = vmatpush1.msra.mxu0 %v616
  %759 = vmatprep.subr.mxu0 0.0
  %760 = vmatpush1.msra.mxu0 %v617
  %761 = vmatprep.subr.mxu0 0.0
  %762 = vmatpush1.msra.mxu0 %v618
  %763 = vmatprep.subr.mxu0 0.0
  %764 = vmatpush1.msra.mxu0 %v619
  %765 = vmatprep.subr.mxu0 0.0
  %766 = vmatpush1.msra.mxu0 %v620
  %767 = vmatprep.subr.mxu0 0.0
  %768 = vmatpush1.msra.mxu0 %v621
  %769 = vmatprep.subr.mxu0 0.0
  %770 = vmatpush1.msra.mxu0 %v622
  %771 = vmatprep.subr.mxu0 0.0
  %772 = vmatpush1.msra.mxu0 %v623
  %773 = vmatprep.subr.mxu0 0.0
  %774 = vmatpush1.msra.mxu0 %v624
  %775 = vmatprep.subr.mxu0 0.0
  %776 = vmatpush1.msra.mxu0 %v625
  %777 = vmatprep.subr.mxu0 0.0
  %778 = vmatpush1.msra.mxu0 %v626
  %779 = vmatprep.subr.mxu0 0.0
  %780 = vmatpush1.msra.mxu0 %v627
  %781 = vmatprep.subr.mxu0 0.0
  %782 = vmatpush1.msra.mxu0 %v628
  %783 = vmatprep.subr.mxu0 0.0
  %784 = vmatpush1.msra.mxu0 0.0
  %785 = vmatprep.subr.mxu0 0.0
  %786 = vmatpush1.msra.mxu0 0.0
  %787 = vmatprep.subr.mxu0 0.0
  %788 = vmatpush1.msra.mxu0 0.0
  %789 = vmatprep.subr.mxu0 0.0
  %790 = vmatpush1.msra.mxu0 0.0
  %791 = vmatprep.subr.mxu0 0.0
  %792 = vmatpush1.msra.mxu0 0.0
  %793 = vmatprep.subr.mxu0 0.0
  %794 = vmatpush1.msra.mxu0 0.0
  %795 = vmatprep.subr.mxu0 0.0
  %796 = vmatpush1.msra.mxu0 0.0
  %797 = vmatprep.subr.mxu0 0.0
  %798 = vmatpush1.msra.mxu0 0.0
  %799 = vmatprep.subr.mxu0 0.0
  %800 = vmatpush1.msra.mxu0 0.0
  %801 = vmatprep.subr.mxu0 0.0
  %802 = vmatpush1.msra.mxu0 0.0
  %803 = vmatprep.subr.mxu0 0.0
  %804 = vmatpush1.msra.mxu0 0.0
  %805 = vmatprep.subr.mxu0 0.0
  %806 = vmatpush1.msra.mxu0 0.0
  %807 = vmatprep.subr.mxu0 0.0
  %808 = vmatpush1.msra.mxu0 0.0
  %809 = vmatprep.subr.mxu0 0.0
  %810 = vmatpush1.msra.mxu0 0.0
  %811 = vmatprep.subr.mxu0 0.0
  %812 = vmatpush1.msra.mxu0 0.0
  %813 = vmatprep.subr.mxu0 0.0
  %814 = vmatpush1.msra.mxu0 0.0
  %815 = vmatprep.mubr.f32.mxu0 0.0
  %816 = vmatmul.mubr.f32.gmra.mrb[0].mxu0 %v607
  %v817 = vpop.f32.mrb[0].mxu0
  %v818 = vadd.f32 %v733, %v817
  %v819 = vpop.f32.mrb[0].mxu0
  %820 = vmatprep.mubr.f32.mxu0 0.0
  %821 = vmatmul.mubr.f32.gmra.mrb[0].mxu0 %v608
  %v822 = vpop.f32.mrb[0].mxu0
  %v823 = vadd.f32 %v738, %v822
  %v824 = vpop.f32.mrb[0].mxu0
  %825 = vmatprep.mubr.f32.mxu0 0.0
  %826 = vmatmul.mubr.f32.gmra.mrb[0].mxu0 %v610
  %v827 = vpop.f32.mrb[0].mxu0
  %v828 = vadd.f32 %v743, %v827
  %v829 = vpop.f32.mrb[0].mxu0
  %830 = vmatprep.mubr.f32.mxu0 0.0
  %831 = vmatmul.mubr.f32.gmra.mrb[0].mxu0 %v611
  %v832 = vpop.f32.mrb[0].mxu0
  %v833 = vadd.f32 %v748, %v832
  %v834 = vpop.f32.mrb[0].mxu0
  %835 = vdwg.mxu0
  %v836 = vrot.slane %v607, 2
  %v837 = vrot.slane %v608, 2
  %v838 = vsel %vm287, %v836, %v837
  %v839 = vrot.slane %v609, 2
  %v840 = vsel %vm287, %v837, %v839
  %v841 = vrot.slane %v610, 2
  %v842 = vrot.slane %v611, 2
  %v843 = vsel %vm287, %v841, %v842
  %v844 = vrot.slane %v612, 2
  %v845 = vsel %vm287, %v842, %v844
  %s850 = scalar_lea.vmem %s2, 256
  %v851 = vld [vmem:[%s850] sm:$0xff]
  %v852 = vld [vmem:[%s850 + $0x8] sm:$0xff]
  %v853 = vld [vmem:[%s850 + $0x10] sm:$0xff]
  %v854 = vld [vmem:[%s850 + $0x18] sm:$0xff]
  %v855 = vld [vmem:[%s850 + $0x20] sm:$0xff]
  %v856 = vld [vmem:[%s850 + $0x28] sm:$0xff]
  %v857 = vld [vmem:[%s850 + $0x30] sm:$0xff]
  %v858 = vld [vmem:[%s850 + $0x38] sm:$0xff]
  %v859 = vld [vmem:[%s850 + $0x40] sm:$0xff]
  %v860 = vld [vmem:[%s850 + $0x48] sm:$0xff]
  %v861 = vld [vmem:[%s850 + $0x50] sm:$0xff]
  %v862 = vld [vmem:[%s850 + $0x58] sm:$0xff]
  %v863 = vld [vmem:[%s850 + $0x60] sm:$0xff]
  %v864 = vld [vmem:[%s850 + $0x68] sm:$0xff]
  %v865 = vld [vmem:[%s850 + $0x70] sm:$0xff]
  %v866 = vld [vmem:[%s850 + $0x78] sm:$0xff]
  %867 = vmatprep.subr.mxu0 0.0
  %868 = vmatpush1.msra.mxu0 %v851
  %869 = vmatprep.subr.mxu0 0.0
  %870 = vmatpush1.msra.mxu0 %v852
  %871 = vmatprep.subr.mxu0 0.0
  %872 = vmatpush1.msra.mxu0 %v853
  %873 = vmatprep.subr.mxu0 0.0
  %874 = vmatpush1.msra.mxu0 %v854
  %875 = vmatprep.subr.mxu0 0.0
  %876 = vmatpush1.msra.mxu0 %v855
  %877 = vmatprep.subr.mxu0 0.0
  %878 = vmatpush1.msra.mxu0 %v856
  %879 = vmatprep.subr.mxu0 0.0
  %880 = vmatpush1.msra.mxu0 %v857
  %881 = vmatprep.subr.mxu0 0.0
  %882 = vmatpush1.msra.mxu0 %v858
  %883 = vmatprep.subr.mxu0 0.0
  %884 = vmatpush1.msra.mxu0 %v859
  %885 = vmatprep.subr.mxu0 0.0
  %886 = vmatpush1.msra.mxu0 %v860
  %887 = vmatprep.subr.mxu0 0.0
  %888 = vmatpush1.msra.mxu0 %v861
  %889 = vmatprep.subr.mxu0 0.0
  %890 = vmatpush1.msra.mxu0 %v862
  %891 = vmatprep.subr.mxu0 0.0
  %892 = vmatpush1.msra.mxu0 %v863
  %893 = vmatprep.subr.mxu0 0.0
  %894 = vmatpush1.msra.mxu0 %v864
  %895 = vmatprep.subr.mxu0 0.0
  %896 = vmatpush1.msra.mxu0 %v865
  %897 = vmatprep.subr.mxu0 0.0
  %898 = vmatpush1.msra.mxu0 %v866
  %899 = vmatprep.subr.mxu0 0.0
  %900 = vmatpush1.msra.mxu0 0.0
  %901 = vmatprep.subr.mxu0 0.0
  %902 = vmatpush1.msra.mxu0 0.0
  %903 = vmatprep.subr.mxu0 0.0
  %904 = vmatpush1.msra.mxu0 0.0
  %905 = vmatprep.subr.mxu0 0.0
  %906 = vmatpush1.msra.mxu0 0.0
  %907 = vmatprep.subr.mxu0 0.0
  %908 = vmatpush1.msra.mxu0 0.0
  %909 = vmatprep.subr.mxu0 0.0
  %910 = vmatpush1.msra.mxu0 0.0
  %911 = vmatprep.subr.mxu0 0.0
  %912 = vmatpush1.msra.mxu0 0.0
  %913 = vmatprep.subr.mxu0 0.0
  %914 = vmatpush1.msra.mxu0 0.0
  %915 = vmatprep.subr.mxu0 0.0
  %916 = vmatpush1.msra.mxu0 0.0
  %917 = vmatprep.subr.mxu0 0.0
  %918 = vmatpush1.msra.mxu0 0.0
  %919 = vmatprep.subr.mxu0 0.0
  %920 = vmatpush1.msra.mxu0 0.0
  %921 = vmatprep.subr.mxu0 0.0
  %922 = vmatpush1.msra.mxu0 0.0
  %923 = vmatprep.subr.mxu0 0.0
  %924 = vmatpush1.msra.mxu0 0.0
  %925 = vmatprep.subr.mxu0 0.0
  %926 = vmatpush1.msra.mxu0 0.0
  %927 = vmatprep.subr.mxu0 0.0
  %928 = vmatpush1.msra.mxu0 0.0
  %929 = vmatprep.subr.mxu0 0.0
  %930 = vmatpush1.msra.mxu0 0.0
  %931 = vmatprep.mubr.f32.mxu0 0.0
  %932 = vmatmul.mubr.f32.gmra.mrb[0].mxu0 %v838
  %v933 = vpop.f32.mrb[0].mxu0
  %v934 = vadd.f32 0.0, %v933
  %v935 = vpop.f32.mrb[0].mxu0
  %936 = vmatprep.mubr.f32.mxu0 0.0
  %937 = vmatmul.mubr.f32.gmra.mrb[0].mxu0 %v840
  %v938 = vpop.f32.mrb[0].mxu0
  %v939 = vadd.f32 0.0, %v938
  %v940 = vpop.f32.mrb[0].mxu0
  %941 = vmatprep.mubr.f32.mxu0 0.0
  %942 = vmatmul.mubr.f32.gmra.mrb[0].mxu0 %v843
  %v943 = vpop.f32.mrb[0].mxu0
  %v944 = vadd.f32 0.0, %v943
  %v945 = vpop.f32.mrb[0].mxu0
  %946 = vmatprep.mubr.f32.mxu0 0.0
  %947 = vmatmul.mubr.f32.gmra.mrb[0].mxu0 %v845
  %v948 = vpop.f32.mrb[0].mxu0
  %v949 = vadd.f32 0.0, %v948
  %v950 = vpop.f32.mrb[0].mxu0
  %951 = vdwg.mxu0
  %v952 = vadd.f32 %v818, %v934
  %v953 = vadd.f32 %v823, %v939
  %v954 = vadd.f32 %v828, %v944
  %v955 = vadd.f32 %v833, %v949
  %v956 = vadd.f32 %v952, %v953
  %v957 = vadd.f32 %v956, %v954
  %v958 = vadd.f32 %v957, %v955
  %v959 = vrot.slane %v958, 4
  %v960 = vadd.f32 %v958, %v959
  %v961 = vrot.slane %v960, 2
  %v962 = vadd.f32 %v960, %v961
  %v963 = vrot.slane %v962, 1
  %v964 = vadd.f32 %v962, %v963
  %v965 = vmul.f32 %v952, %v952
  %v966 = vmul.f32 %v953, %v953
  %v967 = vmul.f32 %v954, %v954
  %v968 = vmul.f32 %v955, %v955
  %v969 = vadd.f32 %v965, %v966
  %v970 = vadd.f32 %v969, %v967
  %v971 = vadd.f32 %v970, %v968
  %v972 = vrot.slane %v971, 4
  %v973 = vadd.f32 %v971, %v972
  %v974 = vrot.slane %v973, 2
  %v975 = vadd.f32 %v973, %v974
  %v976 = vrot.slane %v975, 1
  %v977 = vadd.f32 %v975, %v976
  %978 = vmatprep.subr.mxu0 0.0
  %979 = vmatpush1.msra.mxu0 %v29
  %980 = vmatprep.subr.mxu0 0.0
  %981 = vmatpush1.msra.mxu0 %v30
  %982 = vmatprep.subr.mxu0 0.0
  %983 = vmatpush1.msra.mxu0 %v31
  %984 = vmatprep.subr.mxu0 0.0
  %985 = vmatpush1.msra.mxu0 %v32
  %986 = vmatprep.subr.mxu0 0.0
  %987 = vmatpush1.msra.mxu0 %v33
  %988 = vmatprep.subr.mxu0 0.0
  %989 = vmatpush1.msra.mxu0 %v34
  %990 = vmatprep.subr.mxu0 0.0
  %991 = vmatpush1.msra.mxu0 %v35
  %992 = vmatprep.subr.mxu0 0.0
  %993 = vmatpush1.msra.mxu0 %v36
  %994 = vmatprep.subr.mxu0 0.0
  %995 = vmatpush1.msra.mxu0 %v37
  %996 = vmatprep.subr.mxu0 0.0
  %997 = vmatpush1.msra.mxu0 %v38
  %998 = vmatprep.subr.mxu0 0.0
  %999 = vmatpush1.msra.mxu0 %v39
  %1000 = vmatprep.subr.mxu0 0.0
  %1001 = vmatpush1.msra.mxu0 %v40
  %1002 = vmatprep.subr.mxu0 0.0
  %1003 = vmatpush1.msra.mxu0 %v41
  %1004 = vmatprep.subr.mxu0 0.0
  %1005 = vmatpush1.msra.mxu0 %v42
  %1006 = vmatprep.subr.mxu0 0.0
  %1007 = vmatpush1.msra.mxu0 %v43
  %1008 = vmatprep.subr.mxu0 0.0
  %1009 = vmatpush1.msra.mxu0 %v44
  %1010 = vmatprep.subr.mxu0 0.0
  %1011 = vmatpush1.msra.mxu0 0.0
  %1012 = vmatprep.subr.mxu0 0.0
  %1013 = vmatpush1.msra.mxu0 0.0
  %1014 = vmatprep.subr.mxu0 0.0
  %1015 = vmatpush1.msra.mxu0 0.0
  %1016 = vmatprep.subr.mxu0 0.0
  %1017 = vmatpush1.msra.mxu0 0.0
  %1018 = vmatprep.subr.mxu0 0.0
  %1019 = vmatpush1.msra.mxu0 0.0
  %1020 = vmatprep.subr.mxu0 0.0
  %1021 = vmatpush1.msra.mxu0 0.0
  %1022 = vmatprep.subr.mxu0 0.0
  %1023 = vmatpush1.msra.mxu0 0.0
  %1024 = vmatprep.subr.mxu0 0.0
  %1025 = vmatpush1.msra.mxu0 0.0
  %1026 = vmatprep.subr.mxu0 0.0
  %1027 = vmatpush1.msra.mxu0 0.0
  %1028 = vmatprep.subr.mxu0 0.0
  %1029 = vmatpush1.msra.mxu0 0.0
  %1030 = vmatprep.subr.mxu0 0.0
  %1031 = vmatpush1.msra.mxu0 0.0
  %1032 = vmatprep.subr.mxu0 0.0
  %1033 = vmatpush1.msra.mxu0 0.0
  %1034 = vmatprep.subr.mxu0 0.0
  %1035 = vmatpush1.msra.mxu0 0.0
  %1036 = vmatprep.subr.mxu0 0.0
  %1037 = vmatpush1.msra.mxu0 0.0
  %1038 = vmatprep.subr.mxu0 0.0
  %1039 = vmatpush1.msra.mxu0 0.0
  %1040 = vmatprep.subr.mxu0 0.0
  %1041 = vmatpush1.msra.mxu0 0.0
  %1042 = vmatprep.mubr.f32.mxu0 0.0
  %1043 = vmatmul.mubr.f32.gmra.mrb[0].mxu0 %v964
  %v1044 = vpop.f32.mrb[0].mxu0
  %v1045 = vadd.f32 0.0, %v1044
  %v1046 = vpop.f32.mrb[0].mxu0
  %1047 = vdwg.mxu0
  %1048 = vmatprep.subr.mxu0 0.0
  %1049 = vmatpush1.msra.mxu0 %v29
  %1050 = vmatprep.subr.mxu0 0.0
  %1051 = vmatpush1.msra.mxu0 %v30
  %1052 = vmatprep.subr.mxu0 0.0
  %1053 = vmatpush1.msra.mxu0 %v31
  %1054 = vmatprep.subr.mxu0 0.0
  %1055 = vmatpush1.msra.mxu0 %v32
  %1056 = vmatprep.subr.mxu0 0.0
  %1057 = vmatpush1.msra.mxu0 %v33
  %1058 = vmatprep.subr.mxu0 0.0
  %1059 = vmatpush1.msra.mxu0 %v34
  %1060 = vmatprep.subr.mxu0 0.0
  %1061 = vmatpush1.msra.mxu0 %v35
  %1062 = vmatprep.subr.mxu0 0.0
  %1063 = vmatpush1.msra.mxu0 %v36
  %1064 = vmatprep.subr.mxu0 0.0
  %1065 = vmatpush1.msra.mxu0 %v37
  %1066 = vmatprep.subr.mxu0 0.0
  %1067 = vmatpush1.msra.mxu0 %v38
  %1068 = vmatprep.subr.mxu0 0.0
  %1069 = vmatpush1.msra.mxu0 %v39
  %1070 = vmatprep.subr.mxu0 0.0
  %1071 = vmatpush1.msra.mxu0 %v40
  %1072 = vmatprep.subr.mxu0 0.0
  %1073 = vmatpush1.msra.mxu0 %v41
  %1074 = vmatprep.subr.mxu0 0.0
  %1075 = vmatpush1.msra.mxu0 %v42
  %1076 = vmatprep.subr.mxu0 0.0
  %1077 = vmatpush1.msra.mxu0 %v43
  %1078 = vmatprep.subr.mxu0 0.0
  %1079 = vmatpush1.msra.mxu0 %v44
  %1080 = vmatprep.subr.mxu0 0.0
  %1081 = vmatpush1.msra.mxu0 0.0
  %1082 = vmatprep.subr.mxu0 0.0
  %1083 = vmatpush1.msra.mxu0 0.0
  %1084 = vmatprep.subr.mxu0 0.0
  %1085 = vmatpush1.msra.mxu0 0.0
  %1086 = vmatprep.subr.mxu0 0.0
  %1087 = vmatpush1.msra.mxu0 0.0
  %1088 = vmatprep.subr.mxu0 0.0
  %1089 = vmatpush1.msra.mxu0 0.0
  %1090 = vmatprep.subr.mxu0 0.0
  %1091 = vmatpush1.msra.mxu0 0.0
  %1092 = vmatprep.subr.mxu0 0.0
  %1093 = vmatpush1.msra.mxu0 0.0
  %1094 = vmatprep.subr.mxu0 0.0
  %1095 = vmatpush1.msra.mxu0 0.0
  %1096 = vmatprep.subr.mxu0 0.0
  %1097 = vmatpush1.msra.mxu0 0.0
  %1098 = vmatprep.subr.mxu0 0.0
  %1099 = vmatpush1.msra.mxu0 0.0
  %1100 = vmatprep.subr.mxu0 0.0
  %1101 = vmatpush1.msra.mxu0 0.0
  %1102 = vmatprep.subr.mxu0 0.0
  %1103 = vmatpush1.msra.mxu0 0.0
  %1104 = vmatprep.subr.mxu0 0.0
  %1105 = vmatpush1.msra.mxu0 0.0
  %1106 = vmatprep.subr.mxu0 0.0
  %1107 = vmatpush1.msra.mxu0 0.0
  %1108 = vmatprep.subr.mxu0 0.0
  %1109 = vmatpush1.msra.mxu0 0.0
  %1110 = vmatprep.subr.mxu0 0.0
  %1111 = vmatpush1.msra.mxu0 0.0
  %1112 = vmatprep.mubr.f32.mxu0 0.0
  %1113 = vmatmul.mubr.f32.gmra.mrb[0].mxu0 %v977
  %v1114 = vpop.f32.mrb[0].mxu0
  %v1115 = vadd.f32 0.0, %v1114
  %v1116 = vpop.f32.mrb[0].mxu0
  %1117 = vdwg.mxu0
  %v1118 = vmul.f32 %v1045, %v1045
  %v1119 = vsub.f32 %v1115, %v1118
  %v1120 = vadd.f32 %v1119, 1e-05
  %v1121 = vrsqrt.pop %v1120
  %v1122 = vmul.f32 %v597, %v1121
  %v1123 = vmul.f32 %v1045, %v1122
  %v1124 = vsub.f32 %v598, %v1123
  %v1126 = vlaneseq
  %v1127 = vshrl.u32 %v1126, 7
  %v1128 = vsub.s32 0, %v1127
  %v1129 = vrot.slane %v1122, %v1128
  %v1131 = vmul.f32 %v952, %v1129
  %v1132 = vmul.f32 %v953, %v1129
  %v1133 = vmul.f32 %v954, %v1129
  %v1134 = vmul.f32 %v955, %v1129
  %v1136 = vlaneseq
  %v1137 = vshrl.u32 %v1136, 7
  %v1138 = vsub.s32 0, %v1137
  %v1139 = vrot.slane %v1124, %v1138
  %v1141 = vadd.f32 %v1131, %v1139
  %v1142 = vadd.f32 %v1132, %v1139
  %v1143 = vadd.f32 %v1133, %v1139
  %v1144 = vadd.f32 %v1134, %v1139
  %v1145 = vmax.f32 %v1141, 0.0
  %v1146 = vmax.f32 %v1142, 0.0
  %v1147 = vmax.f32 %v1143, 0.0
  %v1148 = vmax.f32 %v1144, 0.0
  %1149 = vst [vmem:[%s8] sm:$0xff] %v1145
  %1150 = vst [vmem:[%s8 + $0x8] sm:$0xff] %v1146
  %1151 = vst [vmem:[%s8 + $0x10] sm:$0xff] %v1147
  %1152 = vst [vmem:[%s8 + $0x18] sm:$0xff] %v1148
  // Predicated region
  $region34: #{double_conv.1} parent=0 // pred_check
    _
  $region35: #{double_conv.1} parent=0 // pred_check_branch
    %1154 = sbr.rel (0) target = $region37
  $region36: #{double_conv.1} parent=0 // pred_region
    _
  $region37: #{double_conv.1} parent=0 // pred_fallthru
    _
  // Predicated region
  $region38: #{double_conv.1} parent=0 // pred_check
    _
  $region39: #{double_conv.1} parent=0 // pred_check_branch
    %1156 = sbr.rel (0) target = $region41
  $region40: #{double_conv.1} parent=0 // pred_region
    _
  $region41: #{double_conv.1} parent=0 // pred_fallthru
    _

</llo_original>
